<compile_context>
chip_gen: v5e
topology: v5e:2x2
jax: 0.10.0
libtpu: 0.0.40
codegen_flags: <defaults>
</compile_context>

<pallas_src>
import functools

import jax
import jax.numpy as jnp
from jax import lax
from jax.experimental import pallas as pl
from jax.experimental.pallas import tpu as pltpu

LANES = 128            # vreg lane width
MAX_BLOCK_ROWS = 8192  # (8192, 128) f32 = 4 MiB per input block


def _mape_kernel(pred_ref, true_ref, out_ref, acc_ref, *, rows, needs_mask):
    """Accumulate per-lane sums of |(t - p)/t| over streamed row blocks."""
    i = pl.program_id(0)   # shard axis ("parallel" -> both TCs on v7x)
    j = pl.program_id(1)   # streaming axis ("arbitrary")

    @pl.when(j == 0)
    def _():
        acc_ref[...] = jnp.zeros_like(acc_ref)

    t = true_ref[...].astype(jnp.float32)
    p = pred_ref[...].astype(jnp.float32)

    if needs_mask:
        block_rows = t.shape[0]
        block_idx = i * pl.num_programs(1) + j
        row_ids = block_idx * block_rows + lax.broadcasted_iota(
            jnp.int32, t.shape, 0)
        valid = row_ids < rows
        # neutral values on invalid rows -> exactly zero contribution
        t = jnp.where(valid, t, 1.0)
        p = jnp.where(valid, p, 1.0)

    err = jnp.abs((t - p) / t)
    # per-lane partial sums: VPU adds + one small sublane reduce (XLU)
    acc_ref[...] += jnp.sum(err, axis=0, keepdims=True)

    @pl.when(j == pl.num_programs(1) - 1)
    def _():
        out_ref[...] = acc_ref[...]


def mape_loss(y_pred, y_true):
    """MAPE loss: mean(|(y_true - y_pred)/y_true|) over all elements."""
    assert y_pred.shape == y_true.shape
    n = y_pred.size
    assert n > 0

    # Keep original dtype (kernel upcasts per block); flatten is layout-free.
    pred_flat = jnp.ravel(y_pred)
    true_flat = jnp.ravel(y_true)

    # Pad only when numel is not a multiple of the 128-lane width (at most
    # 127 elements).  Padding uses pred=1 / true=1 (zero error); we divide
    # by the ORIGINAL n below.
    padded_n = pl.cdiv(n, LANES) * LANES
    if padded_n != n:
        pad = padded_n - n
        pred_flat = jnp.concatenate(
            [pred_flat, jnp.ones((pad,), pred_flat.dtype)])
        true_flat = jnp.concatenate(
            [true_flat, jnp.ones((pad,), true_flat.dtype)])

    rows = padded_n // LANES
    pred2d = pred_flat.reshape(rows, LANES)
    true2d = true_flat.reshape(rows, LANES)

    # block_rows is either the full row count (small inputs) or a multiple
    # of 8 (MAX_BLOCK_ROWS), so the (8, 128) block constraint always holds.
    block_rows = min(MAX_BLOCK_ROWS, rows)
    total_blocks = pl.cdiv(rows, block_rows)
    num_shards = 2 if total_blocks >= 2 else 1   # feeds both TCs on v7x
    shard_blocks = pl.cdiv(total_blocks, num_shards)
    # mask needed whenever some (shard, step) covers row indices >= rows
    needs_mask = (num_shards * shard_blocks * block_rows) != rows

    def in_map(i, j):
        # clamp so a block index never points fully outside the array; the
        # in-kernel mask zeroes any duplicated / out-of-range rows.
        return (jnp.minimum(i * shard_blocks + j, total_blocks - 1), 0)

    kernel = functools.partial(_mape_kernel, rows=rows, needs_mask=needs_mask)

    bytes_in = 2 * n * y_pred.dtype.itemsize
    partials = pl.pallas_call(
        kernel,
        out_shape=jax.ShapeDtypeStruct((num_shards, 1, LANES), jnp.float32),
        grid_spec=pltpu.PrefetchScalarGridSpec(
            num_scalar_prefetch=0,
            grid=(num_shards, shard_blocks),
            in_specs=[
                pl.BlockSpec((block_rows, LANES), in_map),
                pl.BlockSpec((block_rows, LANES), in_map),
            ],
            out_specs=pl.BlockSpec((None, 1, LANES), lambda i, j: (i, 0, 0)),
            scratch_shapes=[pltpu.VMEM((1, LANES), jnp.float32)],
        ),
        compiler_params=pltpu.CompilerParams(
            dimension_semantics=("parallel", "arbitrary"),
            vmem_limit_bytes=32 * 1024 * 1024,
        ),
        cost_estimate=pl.CostEstimate(
            flops=4 * n, transcendentals=0,
            bytes_accessed=bytes_in + num_shards * LANES * 4),
    )(pred2d, true2d)

    # single cross-lane reduction, done once (tiny: num_shards * 128 floats)
    return jnp.sum(partials) / n


if __name__ == "__main__":
    key = jax.random.PRNGKey(0)
    k1, k2, k3, k4 = jax.random.split(key, 4)

    # --- primary check: small NCHW-like tensor ------------------------------
    shape = (2, 4, 16, 16)
    y_pred = jax.random.normal(k1, shape, dtype=jnp.float32)
    # keep y_true away from zero (MAPE is undefined at y_true == 0)
    y_true = jax.random.uniform(k2, shape, dtype=jnp.float32,
                                minval=0.5, maxval=2.0)

    loss = mape_loss(y_pred, y_true)
    jax.block_until_ready(loss)
    ref = jnp.mean(jnp.abs((y_true - y_pred) / y_true))
    assert jnp.allclose(loss, ref, rtol=1e-5, atol=1e-6), (loss, ref)

    # --- secondary check: multi-block, 2-shard, tail-pad + masked path ------
    n2 = MAX_BLOCK_ROWS * LANES + 555   # > one block, not a multiple of 128
    y_pred2 = jax.random.normal(k3, (n2,), dtype=jnp.float32)
    y_true2 = jax.random.uniform(k4, (n2,), dtype=jnp.float32,
                                 minval=0.5, maxval=2.0)
    loss2 = mape_loss(y_pred2, y_true2)
    jax.block_until_ready(loss2)
    ref2 = jnp.mean(jnp.abs((y_true2 - y_pred2) / y_true2))
    assert jnp.allclose(loss2, ref2, rtol=1e-4, atol=1e-6), (loss2, ref2)

    print("KERNEL_OK")
</pallas_src>

<mosaic_0001>
module attributes {stable_mosaic.version = 11 : i64} {
  func.func @_mape_kernel(%arg0: i32, %arg1: i32, %arg2: memref<16x128xf32, #tpu.memory_space<vmem>>, %arg3: memref<16x128xf32, #tpu.memory_space<vmem>>, %arg4: memref<1x1x128xf32, #tpu.memory_space<vmem>>, %arg5: memref<1x128xf32, #tpu.memory_space<vmem>>) attributes {dimension_semantics = [#tpu.dimension_semantics<parallel>, #tpu.dimension_semantics<arbitrary>], iteration_bounds = array<i64: 1, 1>, scalar_prefetch = 0 : i64, scratch_operands = 1 : i64, tpu.core_type = #tpu.core_type<tc>, window_params = [{transform_indices = @transform_0, window_bounds = array<i64: 16, 128>}, {transform_indices = @transform_1, window_bounds = array<i64: 16, 128>}, {transform_indices = @transform_2, window_bounds = array<i64: 1, 1, 128>}]} {
    %c0_i32 = arith.constant 0 : i32
    %0 = arith.cmpi eq, %arg1, %c0_i32 : i32
    %1 = arith.extui %0 : i1 to i32
    %c0_i32_0 = arith.constant 0 : i32
    %2 = arith.cmpi ne, %1, %c0_i32_0 : i32
    scf.if %2 {
      %cst_10 = arith.constant 0.000000e+00 : f32
      %16 = vector.broadcast %cst_10 : f32 to vector<1x128xf32>
      %c0_11 = arith.constant 0 : index
      %c0_12 = arith.constant 0 : index
      %17 = vector.load %arg5[%c0_11, %c0_12] : memref<1x128xf32, #tpu.memory_space<vmem>>, vector<1x128xf32>
      tpu.vector_store %arg5[%c0_11, %c0_12], %16 {strides = array<i32>} : memref<1x128xf32, #tpu.memory_space<vmem>>, vector<1x128xf32>,
    } else {
    }
    %c0 = arith.constant 0 : index
    %c0_1 = arith.constant 0 : index
    %3 = vector.load %arg3[%c0, %c0_1] : memref<16x128xf32, #tpu.memory_space<vmem>>, vector<16x128xf32>
    %c0_2 = arith.constant 0 : index
    %c0_3 = arith.constant 0 : index
    %4 = vector.load %arg2[%c0_2, %c0_3] : memref<16x128xf32, #tpu.memory_space<vmem>>, vector<16x128xf32>
    %5 = arith.subf %3, %4 : vector<16x128xf32>
    %6 = arith.divf %5, %3 : vector<16x128xf32>
    %7 = math.absf %6 : vector<16x128xf32>
    %c0_4 = arith.constant 0 : index
    %c0_5 = arith.constant 0 : index
    %8 = vector.load %arg5[%c0_4, %c0_5] : memref<1x128xf32, #tpu.memory_space<vmem>>, vector<1x128xf32>
    %cst = arith.constant dense<0.000000e+00> : vector<128xf32>
    %9 = vector.multi_reduction <add>, %7, %cst [0] : vector<16x128xf32> to vector<128xf32>
    %10 = vector.shape_cast %9 : vector<128xf32> to vector<1x128xf32>
    %11 = arith.addf %8, %10 : vector<1x128xf32>
    %c0_6 = arith.constant 0 : index
    %c0_7 = arith.constant 0 : index
    %12 = vector.load %arg5[%c0_6, %c0_7] : memref<1x128xf32, #tpu.memory_space<vmem>>, vector<1x128xf32>
    tpu.vector_store %arg5[%c0_6, %c0_7], %11 {strides = array<i32>} : memref<1x128xf32, #tpu.memory_space<vmem>>, vector<1x128xf32>,
    %c0_i32_8 = arith.constant 0 : i32
    %13 = arith.cmpi eq, %arg1, %c0_i32_8 : i32
    %14 = arith.extui %13 : i1 to i32
    %c0_i32_9 = arith.constant 0 : i32
    %15 = arith.cmpi ne, %14, %c0_i32_9 : i32
    scf.if %15 {
      %c0_10 = arith.constant 0 : index
      %c0_11 = arith.constant 0 : index
      %16 = vector.load %arg5[%c0_10, %c0_11] : memref<1x128xf32, #tpu.memory_space<vmem>>, vector<1x128xf32>
      %c0_12 = arith.constant 0 : index
      %c0_13 = arith.constant 0 : index
      %c0_14 = arith.constant 0 : index
      %17 = vector.load %arg4[%c0_12, %c0_13, %c0_14] : memref<1x1x128xf32, #tpu.memory_space<vmem>>, vector<1x1x128xf32>
      %18 = vector.shape_cast %17 : vector<1x1x128xf32> to vector<1x128xf32>
      %19 = vector.shape_cast %16 : vector<1x128xf32> to vector<1x1x128xf32>
      tpu.vector_store %arg4[%c0_12, %c0_13, %c0_14], %19 {strides = array<i32>} : memref<1x1x128xf32, #tpu.memory_space<vmem>>, vector<1x1x128xf32>,
    } else {
    }
    return
  }
  func.func @transform_0(%arg0: i32, %arg1: i32) -> (i32, i32) {
    %c1_i32 = arith.constant 1 : i32
    %0 = arith.muli %arg0, %c1_i32 : i32
    %1 = arith.addi %0, %arg1 : i32
    %c0_i32 = arith.constant 0 : i32
    %2 = arith.minsi %1, %c0_i32 : i32
    %c0_i32_0 = arith.constant 0 : i32
    %c0_i32_1 = arith.constant 0 : i32
    return %2, %c0_i32_0 : i32, i32
  }
  func.func @transform_1(%arg0: i32, %arg1: i32) -> (i32, i32) {
    %c1_i32 = arith.constant 1 : i32
    %0 = arith.muli %arg0, %c1_i32 : i32
    %1 = arith.addi %0, %arg1 : i32
    %c0_i32 = arith.constant 0 : i32
    %2 = arith.minsi %1, %c0_i32 : i32
    %c0_i32_0 = arith.constant 0 : i32
    %c0_i32_1 = arith.constant 0 : i32
    return %2, %c0_i32_0 : i32, i32
  }
  func.func @transform_2(%arg0: i32, %arg1: i32) -> (i32, i32, i32) {
    %c0_i32 = arith.constant 0 : i32
    %c0_i32_0 = arith.constant 0 : i32
    %c0_i32_1 = arith.constant 0 : i32
    return %arg0, %c0_i32, %c0_i32_0 : i32, i32, i32
  }
}

</mosaic_0001>

<llo_original>
// kernel: tpu_custom_call.1
$region0: #{tpu_custom_call.1}
  #allocation0 [shape = 'u32[]', space=smem, size = 0x4, offset = 0x4, fixed_abs, tag = 'smem constant byte address 0x4 - core index']
  #allocation1 [shape = 'u32[72,128]{1,0:T(1,128)}', space=vmem, size = 0x9000, scoped, tag = 'internal scratch']
  #allocation2 [shape = 'f32[1,128]{1,0:T(1,128)}', space=vmem, size = 0x200, scoped, tag = 'scratch operand']
  %s0 = inlined_call_operand.hbm [shape: f32[16,128], index: 0, kind: input, shape index: {}]
  %s1 = inlined_call_operand.hbm [shape: f32[16,128], index: 1, kind: input, shape index: {}]
  %s2 = inlined_call_operand.hbm [shape: f32[1,1,128], index: 2, kind: output, shape index: {}]
  %s3 = sld [smem:[#allocation0]]
  $region34: #{tpu_custom_call.1} parent=0
    _
  %s5 = ssub.s32 1, %s3
  %s6 = scalar_select 0, %s5, %s3
  $region1: #{tpu_custom_call.1} parent=0
    #allocation3 [shape = 'u8[8192]{0}', space=vmem, size = 0x2000, scoped, tag = 'input window, operand 0, single buffered']
    #allocation4 [shape = 's32[1]{0}', space=sflag, size = 0x4, scoped, tag = 'scoped memory for tpu_custom_call.1']
    #allocation5 [shape = 's32[1]{0}', space=sflag, size = 0x4, scoped, tag = 'scoped memory for tpu_custom_call.1']
    #allocation6 [shape = 'u8[8192]{0}', space=vmem, size = 0x2000, scoped, tag = 'input window, operand 1, single buffered']
    #allocation7 [shape = 's32[1]{0}', space=sflag, size = 0x4, scoped, tag = 'scoped memory for tpu_custom_call.1']
    #allocation8 [shape = 'u8[512]{0}', space=vmem, size = 0x400, scoped, tag = 'output window, operand 0, single buffered']
    %7 = vsyncpa [#allocation4], 0
    %8 = vsyncpa [#allocation7], 0
    %9 = vsyncpa [#allocation5], 0
    // Predicated region
    $region2: #{tpu_custom_call.1} parent=1 // pred_check
      _
    $region3: #{tpu_custom_call.1} parent=1 // pred_check_branch
      %11 = sbr.rel (0) target = $region5
    $region4: #{tpu_custom_call.1} parent=1 // pred_region
      %s12 = sadd.s32 0, 0
      %p13 = scmp.lt.s32.totalorder %s12, 0
      %s14 = scalar_select %p13, %s12, 0
      %s15 = smul.u32 2, %s14
      %17 = vsyncadd [#allocation4], 0
      %s18 = smul.addr %s15, 8
      %s19 = scalar_lea.hbm %s0, %s18
      %s20 = sshll.u32 %s19, 4
      %s21 = int_to_ptr.hbm [resolvable:$true] %s20
      %s22 = sshll.u32 [#allocation3], 4
      %s23 = int_to_ptr.vmem [resolvable:$true] %s22
      %28 = dma.hbm_to_vmem [thread:$0]  %s21, 256, %s23, [#allocation4], 128, 128, 8
    $region5: #{tpu_custom_call.1} parent=1 // pred_fallthru
      _
    // Predicated region
    $region6: #{tpu_custom_call.1} parent=1 // pred_check
      _
    $region7: #{tpu_custom_call.1} parent=1 // pred_check_branch
      %30 = sbr.rel (0) target = $region9
    $region8: #{tpu_custom_call.1} parent=1 // pred_region
      %s31 = sadd.s32 0, 0
      %p32 = scmp.lt.s32.totalorder %s31, 0
      %s33 = scalar_select %p32, %s31, 0
      %s34 = smul.u32 2, %s33
      %36 = vsyncadd [#allocation7], 0
      %s37 = smul.addr %s34, 8
      %s38 = scalar_lea.hbm %s1, %s37
      %s39 = sshll.u32 %s38, 4
      %s40 = int_to_ptr.hbm [resolvable:$true] %s39
      %s41 = sshll.u32 [#allocation6], 4
      %s42 = int_to_ptr.vmem [resolvable:$true] %s41
      %47 = dma.hbm_to_vmem [thread:$0]  %s40, 256, %s42, [#allocation7], 128, 128, 8
    $region9: #{tpu_custom_call.1} parent=1 // pred_fallthru
      _
    // Predicated region
    $region10: #{tpu_custom_call.1} parent=1 // pred_check
      _
    $region11: #{tpu_custom_call.1} parent=1 // pred_check_branch
      %49 = sbr.rel (0) target = $region13
    $region12: #{tpu_custom_call.1} parent=1 // pred_region
      %51 = dma.done [#allocation4], 256
    $region13: #{tpu_custom_call.1} parent=1 // pred_fallthru
      _
    // Predicated region
    $region14: #{tpu_custom_call.1} parent=1 // pred_check
      _
    $region15: #{tpu_custom_call.1} parent=1 // pred_check_branch
      %53 = sbr.rel (0) target = $region17
    $region16: #{tpu_custom_call.1} parent=1 // pred_region
      %55 = dma.done [#allocation7], 256
    $region17: #{tpu_custom_call.1} parent=1 // pred_fallthru
      _
    %s56 = sadd.s32 0, 0
    %p57 = scmp.lt.s32.totalorder %s56, 0
    %s58 = scalar_select %p57, %s56, 0
    %s59 = smul.u32 2, %s58
    %s60 = sadd.s32 0, 0
    %p61 = scmp.lt.s32.totalorder %s60, 0
    %s62 = scalar_select %p61, %s60, 0
    %s63 = smul.u32 2, %s62
    %p64 = scmp.eq.s32.totalorder 0, 0
    // Predicated region
    $region18: #{tpu_custom_call.1} parent=1 // pred_check
      %p65 = pneg %p64
    $region19: #{tpu_custom_call.1} parent=1 // pred_check_branch
      %67 = sbr.rel (%p65) target = $region21
    $region20: #{tpu_custom_call.1} parent=1 // pred_region
      %68 = vst [vmem:[#allocation2] sm:$0x1] 0.0
    $region21: #{tpu_custom_call.1} parent=1 // pred_fallthru
      _
    %v69 = vld [vmem:[#allocation6] sm:$0xff]
    %v70 = vld [vmem:[#allocation6 + $0x8] sm:$0xff]
    %v71 = vld [vmem:[#allocation3] sm:$0xff]
    %v72 = vld [vmem:[#allocation3 + $0x8] sm:$0xff]
    %v73 = vsub.f32 %v69, %v71
    %v74 = vsub.f32 %v70, %v72
    %v75 = vrcp.pop %v69
    %v76 = vmul.f32 %v69, %v75
    %v77 = vsub.f32 1.0, %v76
    %v78 = vmul.f32 %v75, %v77
    %v79 = vadd.f32 %v75, %v78
    %vm80 = vweird.f32 %v69
    %vm81 = vweird.f32 %v75
    %vm82 = vmor %vm80, %vm81
    %v83 = vsel %vm82, %v75, %v79
    %v84 = vand.u32 2147483647, %v69
    %vm85 = vcmp.eq.f32.partialorder %v84, 8.507059e+37
    %v86 = vand.u32 %v69, 2147483648
    %v87 = vor.u32 1.1754944e-38, %v86
    %v88 = vsel %vm85, %v87, %v83
    %v89 = vmul.f32 %v73, %v88
    %v90 = vrcp.pop %v70
    %v91 = vmul.f32 %v70, %v90
    %v92 = vsub.f32 1.0, %v91
    %v93 = vmul.f32 %v90, %v92
    %v94 = vadd.f32 %v90, %v93
    %vm95 = vweird.f32 %v70
    %vm96 = vweird.f32 %v90
    %vm97 = vmor %vm95, %vm96
    %v98 = vsel %vm97, %v90, %v94
    %v99 = vand.u32 2147483647, %v70
    %vm100 = vcmp.eq.f32.partialorder %v99, 8.507059e+37
    %v101 = vand.u32 %v70, 2147483648
    %v102 = vor.u32 1.1754944e-38, %v101
    %v103 = vsel %vm100, %v102, %v98
    %v104 = vmul.f32 %v74, %v103
    %v105 = vand.u32 2147483647, %v89
    %v106 = vand.u32 2147483647, %v104
    %v107 = vld [vmem:[#allocation2] sm:$0x1]
    %v108 = vadd.f32 %v105, %v106
    %v109 = vrot.slane %v108, 4
    %v110 = vadd.f32 %v108, %v109
    %v111 = vrot.slane %v110, 2
    %v112 = vadd.f32 %v110, %v111
    %v113 = vrot.slane %v112, 1
    %v114 = vadd.f32 %v112, %v113
    %v115 = vadd.f32 %v107, %v114
    %116 = vst [vmem:[#allocation2] sm:$0x1] %v115
    // Predicated region
    $region22: #{tpu_custom_call.1} parent=1 // pred_check
      %p117 = pneg %p64
    $region23: #{tpu_custom_call.1} parent=1 // pred_check_branch
      %119 = sbr.rel (%p117) target = $region25
    $region24: #{tpu_custom_call.1} parent=1 // pred_region
      %v120 = vld [vmem:[#allocation2] sm:$0x1]
      %121 = vst [vmem:[#allocation8] sm:$0x1] %v120
    $region25: #{tpu_custom_call.1} parent=1 // pred_fallthru
      _
    // Predicated region
    $region26: #{tpu_custom_call.1} parent=1 // pred_check
      _
    $region27: #{tpu_custom_call.1} parent=1 // pred_check_branch
      %123 = sbr.rel (0) target = $region29
    $region28: #{tpu_custom_call.1} parent=1 // pred_region
      %125 = vsyncadd [#allocation5], 0
      %s127 = sshll.u32 [#allocation8], 4
      %s128 = int_to_ptr.vmem [resolvable:$true] %s127
      %s129 = sshll.u32 %s2, 4
      %s130 = int_to_ptr.hbm [resolvable:$true] %s129
      %132 = dma.vmem_to_hbm [thread:$0]  %s128, 16, %s130, [#allocation5]
    $region29: #{tpu_custom_call.1} parent=1 // pred_fallthru
      _
    // Predicated region
    $region30: #{tpu_custom_call.1} parent=1 // pred_check
      _
    $region31: #{tpu_custom_call.1} parent=1 // pred_check_branch
      %134 = sbr.rel (0) target = $region33
    $region32: #{tpu_custom_call.1} parent=1 // pred_region
      %136 = dma.done [#allocation5], 16
    $region33: #{tpu_custom_call.1} parent=1 // pred_fallthru
      _
    %137 = vsyncpa [#allocation4], 1
    %138 = vsyncpa [#allocation7], 1
    %139 = vsyncpa [#allocation5], 1

</llo_original>
